<compile_context>
chip_gen: v6e
topology: v6e:2x2x1
jax: 0.10.0
libtpu: 0.0.40
codegen_flags: <defaults>
</compile_context>

<pallas_src>
import jax
import jax.numpy as jnp
from jax.experimental import pallas as pl
from jax.experimental.pallas import tpu as pltpu

LANE = 128        # TPU lane width
NEG_INF = -1e30   # finite "-inf" for padded logit columns (exp() == 0, stays f32)


# ------------------------- Pallas kernel -------------------------------------
def mlp_logsoftmax_kernel(x_ref, w1_ref, b1_ref, w2_ref, b2_ref,
                          w3_ref, b3_ref, o_ref):
    out_dim = o_ref.shape[-1]

    # In-kernel cast to bf16 (MXU operand dtype) -- cheap VPU op hidden under the x DMA.
    x = x_ref[...].astype(jnp.bfloat16)

    # Hidden layers: f32 MXU accumulation; bias+ReLU in the bias dtype (bf16 on v6e/v7x,
    # f32 on v5e -- decided in prepare_params), then back to bf16 for the next matmul.
    h = jnp.dot(x, w1_ref[...], preferred_element_type=jnp.float32)
    h = jnp.maximum(h.astype(b1_ref.dtype) + b1_ref[...], 0).astype(jnp.bfloat16)

    h = jnp.dot(h, w2_ref[...], preferred_element_type=jnp.float32)
    h = jnp.maximum(h.astype(b2_ref.dtype) + b2_ref[...], 0).astype(jnp.bfloat16)

    # Final layer: columns lane-padded to 128; padded bias entries are NEG_INF (f32) so
    # those columns contribute exp() == 0 to the softmax below.
    logits = jnp.dot(h, w3_ref[...], preferred_element_type=jnp.float32) + b3_ref[...]

    # Numerically stable log-softmax over dim=1 (feature axis), in f32.
    m = jnp.max(logits, axis=-1, keepdims=True)
    shifted = logits - m
    lse = jnp.log(jnp.sum(jnp.exp(shifted), axis=-1, keepdims=True))

    # Store only the real out_dim columns -> 8x smaller HBM writeback.
    o_ref[...] = (shifted - lse)[:, :out_dim].astype(o_ref.dtype)


# ------------------------- helpers -------------------------------------------
def _round_up(n, m):
    return ((n + m - 1) // m) * m


def _pad_axis(a, axis, size, value):
    pad = size - a.shape[axis]
    if pad <= 0:
        return a
    widths = [(0, 0)] * a.ndim
    widths[axis] = (0, pad)
    return jnp.pad(a, widths, constant_values=value)


def _default_elementwise_bf16():
    """bf16 VALU exists on v6e/v7x; v5e and earlier must keep elementwise math in f32."""
    try:
        kind = jax.devices()[0].device_kind.lower()
    except Exception:
        return False
    return ("v6" in kind) or ("v7" in kind) or ("7x" in kind)


# ------------------------- one-time weight preparation ------------------------
def prepare_params(params, *, elementwise_bf16=None):
    """bf16-cast and lane-pad the weights ONCE (do not call per forward step).

    params: ((w1, b1), (w2, b2), (w3, b3)); weights (fan_in, fan_out), biases (1, fan_out).
    elementwise_bf16: run hidden bias+ReLU in bf16 (True on v6e/v7x).  None = auto-detect.
    """
    if elementwise_bf16 is None:
        elementwise_bf16 = _default_elementwise_bf16()
    ew = jnp.bfloat16 if elementwise_bf16 else jnp.float32

    (w1, b1), (w2, b2), (w3, b3) = params
    in_dim = w1.shape[0]
    out_dim = w3.shape[1]
    h1p = _round_up(w1.shape[1], LANE)
    h2p = _round_up(w2.shape[1], LANE)
    out_pad = _round_up(out_dim, LANE)

    w1p = _pad_axis(w1, 1, h1p, 0.0).astype(jnp.bfloat16)
    b1p = _pad_axis(b1, 1, h1p, 0.0).astype(ew)
    w2p = _pad_axis(_pad_axis(w2, 0, h1p, 0.0), 1, h2p, 0.0).astype(jnp.bfloat16)
    b2p = _pad_axis(b2, 1, h2p, 0.0).astype(ew)
    w3p = _pad_axis(_pad_axis(w3, 0, h2p, 0.0), 1, out_pad, 0.0).astype(jnp.bfloat16)
    # Pad b3 in f32 and KEEP it f32: NEG_INF must stay a finite f32, never a bf16 -inf.
    b3p = _pad_axis(b3.astype(jnp.float32), 1, out_pad, NEG_INF)

    return {"arrays": (w1p, b1p, w2p, b2p, w3p, b3p),
            "in_dim": in_dim, "out_dim": out_dim, "ew_dtype": ew}


# ------------------------- wrapper -------------------------------------------
def custom_classifier_forward(x, prepared, *, batch_tile=1024, single_shot_max=256):
    """Eval-mode forward of CustomClassifier (Dropout == identity).

    x: (B, in_features) array (any float dtype; cast to bf16 inside the kernel).
    prepared: output of prepare_params().
    batch_tile: batch rows per grid step for the tiled path (1024-2048 amortizes the
      ~0.35us per-step overhead; VMEM stays far below the limit on every generation).
    single_shot_max: below this batch size, run gridless with everything resident.
    """
    w1, b1, w2, b2, w3, b3 = prepared["arrays"]
    out_dim = prepared["out_dim"]
    B, in_dim = x.shape
    assert in_dim == prepared["in_dim"], "input feature size mismatch"
    h1p, h2p, out_pad = w1.shape[1], w2.shape[1], w3.shape[1]

    cost = pl.CostEstimate(
        flops=2 * B * (in_dim * h1p + h1p * h2p + h2p * out_pad),
        transcendentals=B * out_pad,  # exp in the log-softmax
        bytes_accessed=(x.dtype.itemsize * x.size
                        + 2 * (w1.size + w2.size + w3.size)
                        + b1.dtype.itemsize * b1.size
                        + b2.dtype.itemsize * b2.size
                        + 4 * b3.size
                        + 4 * B * out_dim),
    )

    # ---------------- small batch: single shot, no grid ----------------------
    if B <= single_shot_max:
        vmem = pl.BlockSpec(memory_space=pltpu.MemorySpace.VMEM)
        return pl.pallas_call(
            mlp_logsoftmax_kernel,
            out_shape=jax.ShapeDtypeStruct((B, out_dim), jnp.float32),
            in_specs=[vmem] * 7,
            out_specs=vmem,
            cost_estimate=cost,
        )(x, w1, b1, w2, b2, w3, b3)

    # ---------------- large batch: tile the batch axis -----------------------
    tile = min(batch_tile, _round_up(B, 8))
    if pl.cdiv(B, tile) == 1 and B >= 16:
        # Always >= 2 grid steps so both v7x TensorCores get work.
        tile = _round_up(pl.cdiv(B, 2), 8)
    tile = max(tile, 8)
    n_tiles = pl.cdiv(B, tile)   # ragged last block handled by Pallas block clipping

    in_specs = [
        pl.BlockSpec((tile, in_dim), lambda i: (i, 0)),   # x streamed (native dtype)
        pl.BlockSpec((in_dim, h1p), lambda i: (0, 0)),    # weights resident (block idx
        pl.BlockSpec((1, h1p), lambda i: (0, 0)),         #  unchanged -> no re-DMA)
        pl.BlockSpec((h1p, h2p), lambda i: (0, 0)),
        pl.BlockSpec((1, h2p), lambda i: (0, 0)),
        pl.BlockSpec((h2p, out_pad), lambda i: (0, 0)),
        pl.BlockSpec((1, out_pad), lambda i: (0, 0)),
    ]
    # Last dim out_dim is legal (equals full array dim); trades masked VMEM stores for an
    # 8x smaller HBM writeback and kills the post-kernel slice pass.
    out_spec = pl.BlockSpec((tile, out_dim), lambda i: (i, 0))

    compiler_params = pltpu.CompilerParams(
        dimension_semantics=("parallel",),
        # Only needed on v5e (16 MiB scoped-VMEM default) when tiles get very large.
        vmem_limit_bytes=(64 << 20) if tile >= 4096 else None,
    )

    out = pl.pallas_call(
        mlp_logsoftmax_kernel,
        out_shape=jax.ShapeDtypeStruct((B, out_dim), jnp.float32),
        grid_spec=pltpu.PrefetchScalarGridSpec(
            num_scalar_prefetch=0,
            grid=(n_tiles,),
            in_specs=in_specs,
            out_specs=out_spec,
        ),
        compiler_params=compiler_params,
        cost_estimate=cost,
    )(x, w1, b1, w2, b2, w3, b3)
    # No slicing: output is exactly (B, out_dim); rows of the ragged last block beyond B
    # are never written back by Pallas.
    return out


# ------------------------- deterministic parameter init ----------------------
def init_linear(key, fan_in, fan_out):
    """Mimic PyTorch nn.Linear default init: U(-1/sqrt(fan_in), 1/sqrt(fan_in))."""
    kw, kb = jax.random.split(key)
    bound = 1.0 / jnp.sqrt(fan_in)
    w = jax.random.uniform(kw, (fan_in, fan_out), jnp.float32, -bound, bound)
    b = jax.random.uniform(kb, (1, fan_out), jnp.float32, -bound, bound)
    return w, b


if __name__ == "__main__":
    # Module-consistent shapes: input_size=256, hidden_units=[128, 64], output_size=16.
    B, INPUT_SIZE = 8, 256
    HIDDEN_UNITS = [128, 64]
    OUTPUT_SIZE = 16

    key = jax.random.PRNGKey(0)
    kx, k1, k2, k3, kx2 = jax.random.split(key, 5)

    x = jax.random.normal(kx, (B, INPUT_SIZE), jnp.float32)
    params = (
        init_linear(k1, INPUT_SIZE, HIDDEN_UNITS[0]),
        init_linear(k2, HIDDEN_UNITS[0], HIDDEN_UNITS[1]),
        init_linear(k3, HIDDEN_UNITS[1], OUTPUT_SIZE),
    )

    def reference(xv, ew_dtype):
        # Mirrors the kernel numerics: bf16 MXU operands, f32 accumulation, bias+ReLU in
        # ew_dtype, f32 log-softmax.
        bf = jnp.bfloat16
        (w1, b1), (w2, b2), (w3, b3) = params
        h = jnp.dot(xv.astype(bf), w1.astype(bf), preferred_element_type=jnp.float32)
        h = jnp.maximum(h.astype(ew_dtype) + b1.astype(ew_dtype), 0).astype(bf)
        h = jnp.dot(h, w2.astype(bf), preferred_element_type=jnp.float32)
        h = jnp.maximum(h.astype(ew_dtype) + b2.astype(ew_dtype), 0).astype(bf)
        logits = jnp.dot(h, w3.astype(bf), preferred_element_type=jnp.float32) + b3
        mm = jnp.max(logits, axis=-1, keepdims=True)
        sh = logits - mm
        return sh - jnp.log(jnp.sum(jnp.exp(sh), axis=-1, keepdims=True))

    # 1) Small batch -> single-shot path (no grid); elementwise dtype auto-detected.
    prepared = prepare_params(params)
    out = jax.block_until_ready(custom_classifier_forward(x, prepared))
    assert out.shape == (B, OUTPUT_SIZE)
    assert jnp.allclose(out, reference(x, prepared["ew_dtype"]), atol=2e-3, rtol=2e-3), \
        "mismatch vs reference (single-shot path)"

    # 2) Larger ragged batch -> tiled grid path (2 steps, Pallas-clipped last block),
    #    forcing the f32-elementwise (v5e-safe) variant.
    B2 = 300
    x2 = jax.random.normal(kx2, (B2, INPUT_SIZE), jnp.float32)
    prepared_f32 = prepare_params(params, elementwise_bf16=False)
    out2 = jax.block_until_ready(
        custom_classifier_forward(x2, prepared_f32, batch_tile=1024, single_shot_max=128))
    assert out2.shape == (B2, OUTPUT_SIZE)
    assert jnp.allclose(out2, reference(x2, jnp.float32), atol=2e-3, rtol=2e-3), \
        "mismatch vs reference (tiled path)"

    print("KERNEL_OK")
</pallas_src>

<mosaic_0001>
module attributes {stable_mosaic.version = 11 : i64} {
  func.func @mlp_logsoftmax_kernel(%arg0: memref<8x256xf32, #tpu.memory_space<vmem>>, %arg1: memref<256x128xbf16, #tpu.memory_space<vmem>>, %arg2: memref<1x128xf32, #tpu.memory_space<vmem>>, %arg3: memref<128x128xbf16, #tpu.memory_space<vmem>>, %arg4: memref<1x128xf32, #tpu.memory_space<vmem>>, %arg5: memref<128x128xbf16, #tpu.memory_space<vmem>>, %arg6: memref<1x128xf32, #tpu.memory_space<vmem>>, %arg7: memref<8x16xf32, #tpu.memory_space<vmem>>) attributes {dimension_semantics = [], scalar_prefetch = 0 : i64, scratch_operands = 0 : i64, tpu.core_type = #tpu.core_type<tc>} {
    %c0 = arith.constant 0 : index
    %c0_0 = arith.constant 0 : index
    %0 = vector.load %arg0[%c0, %c0_0] : memref<8x256xf32, #tpu.memory_space<vmem>>, vector<8x256xf32>
    %1 = arith.truncf %0 : vector<8x256xf32> to vector<8x256xbf16>
    %c0_1 = arith.constant 0 : index
    %c0_2 = arith.constant 0 : index
    %2 = vector.load %arg1[%c0_1, %c0_2] : memref<256x128xbf16, #tpu.memory_space<vmem>>, vector<256x128xbf16>
    %cst = arith.constant dense<0.000000e+00> : vector<8x128xf32>
    %3 = tpu.matmul %1, %2, %cst {dimension_numbers = #tpu.dot_dimension_numbers<[1], [0], [0], [1], [0, 0, 1, 1], [], []>} : vector<8x256xbf16>, vector<256x128xbf16>, vector<8x128xf32> -> vector<8x128xf32>
    %c0_3 = arith.constant 0 : index
    %c0_4 = arith.constant 0 : index
    %4 = vector.load %arg2[%c0_3, %c0_4] : memref<1x128xf32, #tpu.memory_space<vmem>>, vector<1x128xf32>
    %5 = vector.broadcast %4 : vector<1x128xf32> to vector<8x128xf32>
    %6 = arith.addf %3, %5 : vector<8x128xf32>
    %cst_5 = arith.constant 0.000000e+00 : f32
    %7 = vector.broadcast %cst_5 : f32 to vector<8x128xf32>
    %8 = arith.maximumf %6, %7 : vector<8x128xf32>
    %9 = arith.truncf %8 : vector<8x128xf32> to vector<8x128xbf16>
    %c0_6 = arith.constant 0 : index
    %c0_7 = arith.constant 0 : index
    %10 = vector.load %arg3[%c0_6, %c0_7] : memref<128x128xbf16, #tpu.memory_space<vmem>>, vector<128x128xbf16>
    %cst_8 = arith.constant dense<0.000000e+00> : vector<8x128xf32>
    %11 = tpu.matmul %9, %10, %cst_8 {dimension_numbers = #tpu.dot_dimension_numbers<[1], [0], [0], [1], [0, 0, 1, 1], [], []>} : vector<8x128xbf16>, vector<128x128xbf16>, vector<8x128xf32> -> vector<8x128xf32>
    %c0_9 = arith.constant 0 : index
    %c0_10 = arith.constant 0 : index
    %12 = vector.load %arg4[%c0_9, %c0_10] : memref<1x128xf32, #tpu.memory_space<vmem>>, vector<1x128xf32>
    %13 = vector.broadcast %12 : vector<1x128xf32> to vector<8x128xf32>
    %14 = arith.addf %11, %13 : vector<8x128xf32>
    %cst_11 = arith.constant 0.000000e+00 : f32
    %15 = vector.broadcast %cst_11 : f32 to vector<8x128xf32>
    %16 = arith.maximumf %14, %15 : vector<8x128xf32>
    %17 = arith.truncf %16 : vector<8x128xf32> to vector<8x128xbf16>
    %c0_12 = arith.constant 0 : index
    %c0_13 = arith.constant 0 : index
    %18 = vector.load %arg5[%c0_12, %c0_13] : memref<128x128xbf16, #tpu.memory_space<vmem>>, vector<128x128xbf16>
    %cst_14 = arith.constant dense<0.000000e+00> : vector<8x128xf32>
    %19 = tpu.matmul %17, %18, %cst_14 {dimension_numbers = #tpu.dot_dimension_numbers<[1], [0], [0], [1], [0, 0, 1, 1], [], []>} : vector<8x128xbf16>, vector<128x128xbf16>, vector<8x128xf32> -> vector<8x128xf32>
    %c0_15 = arith.constant 0 : index
    %c0_16 = arith.constant 0 : index
    %20 = vector.load %arg6[%c0_15, %c0_16] : memref<1x128xf32, #tpu.memory_space<vmem>>, vector<1x128xf32>
    %21 = vector.broadcast %20 : vector<1x128xf32> to vector<8x128xf32>
    %22 = arith.addf %19, %21 : vector<8x128xf32>
    %cst_17 = arith.constant dense<0xFF800000> : vector<8xf32>
    %23 = vector.multi_reduction <maximumf>, %22, %cst_17 [1] : vector<8x128xf32> to vector<8xf32>
    %24 = vector.shape_cast %23 : vector<8xf32> to vector<8x1xf32>
    %25 = vector.broadcast %24 : vector<8x1xf32> to vector<8x128xf32>
    %26 = arith.subf %22, %25 : vector<8x128xf32>
    %27 = math.exp %26 : vector<8x128xf32>
    %cst_18 = arith.constant dense<0.000000e+00> : vector<8xf32>
    %28 = vector.multi_reduction <add>, %27, %cst_18 [1] : vector<8x128xf32> to vector<8xf32>
    %29 = vector.shape_cast %28 : vector<8xf32> to vector<8x1xf32>
    %30 = math.log %29 : vector<8x1xf32>
    %31 = vector.broadcast %30 : vector<8x1xf32> to vector<8x128xf32>
    %32 = arith.subf %26, %31 : vector<8x128xf32>
    %33 = vector.extract_strided_slice %32 {offsets = [0, 0], sizes = [8, 16], strides = [1, 1]} : vector<8x128xf32> to vector<8x16xf32>
    %c0_19 = arith.constant 0 : index
    %c0_20 = arith.constant 0 : index
    %34 = vector.load %arg7[%c0_19, %c0_20] : memref<8x16xf32, #tpu.memory_space<vmem>>, vector<8x16xf32>
    tpu.vector_store %arg7[%c0_19, %c0_20], %33 {strides = array<i32>} : memref<8x16xf32, #tpu.memory_space<vmem>>, vector<8x16xf32>,
    return
  }
}

</mosaic_0001>

<llo_original>
// kernel: tpu_custom_call.1
$region0: #{tpu_custom_call.1}
  #allocation0 [shape = 'u32[]', space=smem, size = 0x4, offset = 0x4, fixed_abs, tag = 'smem constant byte address 0x4 - core index']
  #allocation1 [shape = 'u32[144,128]{1,0:T(1,128)}', space=vmem, size = 0x12000, scoped, tag = 'internal scratch']
  %s0 = inlined_call_operand.hbm [shape: f32[8,256], index: 0, kind: input, shape index: {}]
  %s1 = inlined_call_operand.hbm [shape: bf16[256,128], index: 1, kind: input, shape index: {}]
  %s2 = inlined_call_operand.vmem [shape: f32[1,128], index: 2, kind: input, shape index: {}]
  %s3 = inlined_call_operand.hbm [shape: bf16[128,128], index: 3, kind: input, shape index: {}]
  %s4 = inlined_call_operand.vmem [shape: f32[1,128], index: 4, kind: input, shape index: {}]
  %s5 = inlined_call_operand.hbm [shape: bf16[128,128], index: 5, kind: input, shape index: {}]
  %s6 = inlined_call_operand.vmem [shape: f32[1,128], index: 6, kind: input, shape index: {}]
  %s7 = inlined_call_operand.hbm [shape: f32[8,16], index: 7, kind: output, shape index: {}]
  %s8 = sld [smem:[#allocation0]]
  $region54: #{tpu_custom_call.1} parent=0
    _
  %s10 = ssub.s32 1, %s8
  %s11 = scalar_select 0, %s10, %s8
  $region1: #{tpu_custom_call.1} parent=0
    #allocation2 [shape = 'u8[8192]{0}', space=vmem, size = 0x2000, scoped, tag = 'input window, operand 0, single buffered']
    #allocation3 [shape = 's32[1]{0}', space=sflag, size = 0x4, scoped, tag = 'scoped memory for tpu_custom_call.1']
    #allocation4 [shape = 's32[1]{0}', space=sflag, size = 0x4, scoped, tag = 'scoped memory for tpu_custom_call.1']
    #allocation5 [shape = 'u8[65536]{0}', space=vmem, size = 0x10000, scoped, tag = 'input window, operand 1, single buffered']
    #allocation6 [shape = 's32[1]{0}', space=sflag, size = 0x4, scoped, tag = 'scoped memory for tpu_custom_call.1']
    #allocation7 [shape = 'u8[32768]{0}', space=vmem, size = 0x8000, scoped, tag = 'input window, operand 3, single buffered']
    #allocation8 [shape = 'u8[32768]{0}', space=vmem, size = 0x8000, scoped, tag = 'input window, operand 5, single buffered']
    #allocation9 [shape = 's32[1]{0}', space=sflag, size = 0x4, scoped, tag = 'scoped memory for tpu_custom_call.1']
    #allocation10 [shape = 'u8[4096]{0}', space=vmem, size = 0x1000, scoped, tag = 'output window, operand 0, single buffered']
    %12 = vsyncpa [#allocation3], 0
    %13 = vsyncpa [#allocation6], 0
    %14 = vsyncpa [#allocation9], 0
    %15 = vsyncpa [#allocation4], 0
    // Predicated region
    $region2: #{tpu_custom_call.1} parent=1 // pred_check
      _
    $region3: #{tpu_custom_call.1} parent=1 // pred_check_branch
      %17 = sbr.rel (0) target = $region5
    $region4: #{tpu_custom_call.1} parent=1 // pred_region
      %s19 = ssub.s32 256, 256
      %20 = vsyncadd [#allocation3], %s19
      %s22 = sshll.u32 [#allocation2], 4
      %s23 = int_to_ptr.vmem [resolvable:$true] %s22
      %25 = dma.hbm_to_vmem [thread:$0]  %s0, 256, %s23, [#allocation3]
    $region5: #{tpu_custom_call.1} parent=1 // pred_fallthru
      _
    // Predicated region
    $region6: #{tpu_custom_call.1} parent=1 // pred_check
      _
    $region7: #{tpu_custom_call.1} parent=1 // pred_check_branch
      %27 = sbr.rel (0) target = $region9
    $region8: #{tpu_custom_call.1} parent=1 // pred_region
      %s29 = ssub.s32 2048, 2048
      %30 = vsyncadd [#allocation6], %s29
      %s31 = sshll.u32 [#allocation5], 4
      %s32 = int_to_ptr.vmem [resolvable:$true] %s31
      %37 = dma.hbm_to_vmem [thread:$0]  %s1, 2048, %s32, [#allocation6], 64, 64, 4
    $region9: #{tpu_custom_call.1} parent=1 // pred_fallthru
      _
    // Predicated region
    $region10: #{tpu_custom_call.1} parent=1 // pred_check
      _
    $region11: #{tpu_custom_call.1} parent=1 // pred_check_branch
      %39 = sbr.rel (0) target = $region13
    $region12: #{tpu_custom_call.1} parent=1 // pred_region
      _
    $region13: #{tpu_custom_call.1} parent=1 // pred_fallthru
      _
    // Predicated region
    $region14: #{tpu_custom_call.1} parent=1 // pred_check
      _
    $region15: #{tpu_custom_call.1} parent=1 // pred_check_branch
      %41 = sbr.rel (0) target = $region17
    $region16: #{tpu_custom_call.1} parent=1 // pred_region
      %s43 = ssub.s32 1024, 1024
      %44 = vsyncadd [#allocation6], %s43
      %s45 = sshll.u32 [#allocation7], 4
      %s46 = int_to_ptr.vmem [resolvable:$true] %s45
      %51 = dma.hbm_to_vmem [thread:$0]  %s3, 1024, %s46, [#allocation6], 64, 64, 4
    $region17: #{tpu_custom_call.1} parent=1 // pred_fallthru
      _
    // Predicated region
    $region18: #{tpu_custom_call.1} parent=1 // pred_check
      _
    $region19: #{tpu_custom_call.1} parent=1 // pred_check_branch
      %53 = sbr.rel (0) target = $region21
    $region20: #{tpu_custom_call.1} parent=1 // pred_region
      _
    $region21: #{tpu_custom_call.1} parent=1 // pred_fallthru
      _
    // Predicated region
    $region22: #{tpu_custom_call.1} parent=1 // pred_check
      _
    $region23: #{tpu_custom_call.1} parent=1 // pred_check_branch
      %55 = sbr.rel (0) target = $region25
    $region24: #{tpu_custom_call.1} parent=1 // pred_region
      %s57 = ssub.s32 1024, 1024
      %58 = vsyncadd [#allocation9], %s57
      %s59 = sshll.u32 [#allocation8], 4
      %s60 = int_to_ptr.vmem [resolvable:$true] %s59
      %65 = dma.hbm_to_vmem [thread:$0]  %s5, 1024, %s60, [#allocation9], 64, 64, 4
    $region25: #{tpu_custom_call.1} parent=1 // pred_fallthru
      _
    // Predicated region
    $region26: #{tpu_custom_call.1} parent=1 // pred_check
      _
    $region27: #{tpu_custom_call.1} parent=1 // pred_check_branch
      %67 = sbr.rel (0) target = $region29
    $region28: #{tpu_custom_call.1} parent=1 // pred_region
      _
    $region29: #{tpu_custom_call.1} parent=1 // pred_fallthru
      _
    // Predicated region
    $region30: #{tpu_custom_call.1} parent=1 // pred_check
      _
    $region31: #{tpu_custom_call.1} parent=1 // pred_check_branch
      %69 = sbr.rel (0) target = $region33
    $region32: #{tpu_custom_call.1} parent=1 // pred_region
      %70 = dma.done [#allocation3], 256
    $region33: #{tpu_custom_call.1} parent=1 // pred_fallthru
      _
    // Predicated region
    $region34: #{tpu_custom_call.1} parent=1 // pred_check
      _
    $region35: #{tpu_custom_call.1} parent=1 // pred_check_branch
      %72 = sbr.rel (0) target = $region37
    $region36: #{tpu_custom_call.1} parent=1 // pred_region
      %73 = dma.done [#allocation6], 2048
    $region37: #{tpu_custom_call.1} parent=1 // pred_fallthru
      _
    // Predicated region
    $region38: #{tpu_custom_call.1} parent=1 // pred_check
      _
    $region39: #{tpu_custom_call.1} parent=1 // pred_check_branch
      %75 = sbr.rel (0) target = $region41
    $region40: #{tpu_custom_call.1} parent=1 // pred_region
      %76 = dma.done [#allocation6], 1024
    $region41: #{tpu_custom_call.1} parent=1 // pred_fallthru
      _
    // Predicated region
    $region42: #{tpu_custom_call.1} parent=1 // pred_check
      _
    $region43: #{tpu_custom_call.1} parent=1 // pred_check_branch
      %78 = sbr.rel (0) target = $region45
    $region44: #{tpu_custom_call.1} parent=1 // pred_region
      %79 = dma.done [#allocation9], 1024
    $region45: #{tpu_custom_call.1} parent=1 // pred_fallthru
      _
    %v81 = vld [vmem:[#allocation2] sm:$0xff]
    %v82 = vld [vmem:[#allocation2 + $0x8] sm:$0xff]
    %v83 = vpack.c.bf16 %v81, %v81
    %v84 = vpack.c.bf16 %v82, %v82
    %v85 = vld [vmem:[#allocation5] sm:$0xf]
    %v86 = vld [vmem:[#allocation5 + $0x4] sm:$0xf]
    %v87 = vld [vmem:[#allocation5 + $0x8] sm:$0xf]
    %v88 = vld [vmem:[#allocation5 + $0xc] sm:$0xf]
    %v89 = vld [vmem:[#allocation5 + $0x10] sm:$0xf]
    %v90 = vld [vmem:[#allocation5 + $0x14] sm:$0xf]
    %v91 = vld [vmem:[#allocation5 + $0x18] sm:$0xf]
    %v92 = vld [vmem:[#allocation5 + $0x1c] sm:$0xf]
    %v93 = vld [vmem:[#allocation5 + $0x20] sm:$0xf]
    %v94 = vld [vmem:[#allocation5 + $0x24] sm:$0xf]
    %v95 = vld [vmem:[#allocation5 + $0x28] sm:$0xf]
    %v96 = vld [vmem:[#allocation5 + $0x2c] sm:$0xf]
    %v97 = vld [vmem:[#allocation5 + $0x30] sm:$0xf]
    %v98 = vld [vmem:[#allocation5 + $0x34] sm:$0xf]
    %v99 = vld [vmem:[#allocation5 + $0x38] sm:$0xf]
    %v100 = vld [vmem:[#allocation5 + $0x3c] sm:$0xf]
    %v101 = vld [vmem:[#allocation5 + $0x40] sm:$0xf]
    %v102 = vld [vmem:[#allocation5 + $0x44] sm:$0xf]
    %v103 = vld [vmem:[#allocation5 + $0x48] sm:$0xf]
    %v104 = vld [vmem:[#allocation5 + $0x4c] sm:$0xf]
    %v105 = vld [vmem:[#allocation5 + $0x50] sm:$0xf]
    %v106 = vld [vmem:[#allocation5 + $0x54] sm:$0xf]
    %v107 = vld [vmem:[#allocation5 + $0x58] sm:$0xf]
    %v108 = vld [vmem:[#allocation5 + $0x5c] sm:$0xf]
    %v109 = vld [vmem:[#allocation5 + $0x60] sm:$0xf]
    %v110 = vld [vmem:[#allocation5 + $0x64] sm:$0xf]
    %v111 = vld [vmem:[#allocation5 + $0x68] sm:$0xf]
    %v112 = vld [vmem:[#allocation5 + $0x6c] sm:$0xf]
    %v113 = vld [vmem:[#allocation5 + $0x70] sm:$0xf]
    %v114 = vld [vmem:[#allocation5 + $0x74] sm:$0xf]
    %v115 = vld [vmem:[#allocation5 + $0x78] sm:$0xf]
    %v116 = vld [vmem:[#allocation5 + $0x7c] sm:$0xf]
    %v117 = vld [vmem:[%s2] sm:$0x1]
    %v119 = vlaneseq
    %v120 = vshrl.u32 %v119, 7
    %v121 = vsub.s32 0, %v120
    %v122 = vrot.slane %v117, %v121
    %v156 = vunpack.c.l.b16 %v85
    %v157 = vunpack.c.l.b16 %v86
    %v158 = vunpack.c.l.b16 %v87
    %v159 = vunpack.c.l.b16 %v88
    %v160 = vunpack.c.l.b16 %v89
    %v161 = vunpack.c.l.b16 %v90
    %v162 = vunpack.c.l.b16 %v91
    %v163 = vunpack.c.l.b16 %v92
    %v164 = vunpack.c.l.b16 %v93
    %v165 = vunpack.c.l.b16 %v94
    %v166 = vunpack.c.l.b16 %v95
    %v167 = vunpack.c.l.b16 %v96
    %v168 = vunpack.c.l.b16 %v97
    %v169 = vunpack.c.l.b16 %v98
    %v170 = vunpack.c.l.b16 %v99
    %v171 = vunpack.c.l.b16 %v100
    %v172 = vunpack.c.l.b16 %v101
    %v173 = vunpack.c.l.b16 %v102
    %v174 = vunpack.c.l.b16 %v103
    %v175 = vunpack.c.l.b16 %v104
    %v176 = vunpack.c.l.b16 %v105
    %v177 = vunpack.c.l.b16 %v106
    %v178 = vunpack.c.l.b16 %v107
    %v179 = vunpack.c.l.b16 %v108
    %v180 = vunpack.c.l.b16 %v109
    %v181 = vunpack.c.l.b16 %v110
    %v182 = vunpack.c.l.b16 %v111
    %v183 = vunpack.c.l.b16 %v112
    %v184 = vunpack.c.l.b16 %v113
    %v185 = vunpack.c.l.b16 %v114
    %v186 = vunpack.c.l.b16 %v115
    %v187 = vunpack.c.l.b16 %v116
    %v188 = vpack.c.b16 %v157, %v156
    %v189 = vpack.c.b16 %v159, %v158
    %v190 = vpack.c.b16 %v161, %v160
    %v191 = vpack.c.b16 %v163, %v162
    %v192 = vpack.c.b16 %v165, %v164
    %v193 = vpack.c.b16 %v167, %v166
    %v194 = vpack.c.b16 %v169, %v168
    %v195 = vpack.c.b16 %v171, %v170
    %v196 = vpack.c.b16 %v173, %v172
    %v197 = vpack.c.b16 %v175, %v174
    %v198 = vpack.c.b16 %v177, %v176
    %v199 = vpack.c.b16 %v179, %v178
    %v200 = vpack.c.b16 %v181, %v180
    %v201 = vpack.c.b16 %v183, %v182
    %v202 = vpack.c.b16 %v185, %v184
    %v203 = vpack.c.b16 %v187, %v186
    %220 = vmatprep.subr.bf16.mxu0 0
    %221 = vmatpush1.bf16.msra.mxu0 %v195
    %222 = vmatprep.subr.bf16.mxu0 0
    %223 = vmatpush1.bf16.msra.mxu0 %v194
    %224 = vmatprep.subr.bf16.mxu0 0
    %225 = vmatpush1.bf16.msra.mxu0 %v193
    %226 = vmatprep.subr.bf16.mxu0 0
    %227 = vmatpush1.bf16.msra.mxu0 %v192
    %228 = vmatprep.subr.bf16.mxu0 0
    %229 = vmatpush1.bf16.msra.mxu0 %v191
    %230 = vmatprep.subr.bf16.mxu0 0
    %231 = vmatpush1.bf16.msra.mxu0 %v190
    %232 = vmatprep.subr.bf16.mxu0 0
    %233 = vmatpush1.bf16.msra.mxu0 %v189
    %234 = vmatprep.subr.bf16.mxu0 0
    %235 = vmatpush1.bf16.msra.mxu0 %v188
    %236 = vmatprep.subr.bf16.mxu0 0
    %237 = vmatpush2.bf16.msra.mxu0 %v203
    %238 = vmatprep.subr.bf16.mxu0 0
    %239 = vmatpush2.bf16.msra.mxu0 %v202
    %240 = vmatprep.subr.bf16.mxu0 0
    %241 = vmatpush2.bf16.msra.mxu0 %v201
    %242 = vmatprep.subr.bf16.mxu0 0
    %243 = vmatpush2.bf16.msra.mxu0 %v200
    %244 = vmatprep.subr.bf16.mxu0 0
    %245 = vmatpush2.bf16.msra.mxu0 %v199
    %246 = vmatprep.subr.bf16.mxu0 0
    %247 = vmatpush2.bf16.msra.mxu0 %v198
    %248 = vmatprep.subr.bf16.mxu0 0
    %249 = vmatpush2.bf16.msra.mxu0 %v197
    %250 = vmatprep.subr.bf16.mxu0 0
    %251 = vmatpush2.bf16.msra.mxu0 %v196
    %252 = vmatprep.mubr.bf16.mxu0 %v84
    %253 = vmatmul.mubr.bf16.gmra.mxu0 %v83
    %v254 = vpop.f32.mrf.mxu0
    %v255 = vadd.f32 %v122, %v254
    %v256 = vpop.f32.mrf.mxu0
    %v257 = vpop.f32.mrf.mxu0
    %v258 = vpop.f32.mrf.mxu0
    %259 = vdwg.mxu0
    %v260 = vmax.f32 %v255, 0.0
    %v261 = vpack.c.bf16 %v260, %v260
    %v262 = vld [vmem:[#allocation7] sm:$0xf]
    %v263 = vld [vmem:[#allocation7 + $0x4] sm:$0xf]
    %v264 = vld [vmem:[#allocation7 + $0x8] sm:$0xf]
    %v265 = vld [vmem:[#allocation7 + $0xc] sm:$0xf]
    %v266 = vld [vmem:[#allocation7 + $0x10] sm:$0xf]
    %v267 = vld [vmem:[#allocation7 + $0x14] sm:$0xf]
    %v268 = vld [vmem:[#allocation7 + $0x18] sm:$0xf]
    %v269 = vld [vmem:[#allocation7 + $0x1c] sm:$0xf]
    %v270 = vld [vmem:[#allocation7 + $0x20] sm:$0xf]
    %v271 = vld [vmem:[#allocation7 + $0x24] sm:$0xf]
    %v272 = vld [vmem:[#allocation7 + $0x28] sm:$0xf]
    %v273 = vld [vmem:[#allocation7 + $0x2c] sm:$0xf]
    %v274 = vld [vmem:[#allocation7 + $0x30] sm:$0xf]
    %v275 = vld [vmem:[#allocation7 + $0x34] sm:$0xf]
    %v276 = vld [vmem:[#allocation7 + $0x38] sm:$0xf]
    %v277 = vld [vmem:[#allocation7 + $0x3c] sm:$0xf]
    %v278 = vld [vmem:[%s4] sm:$0x1]
    %v280 = vlaneseq
    %v281 = vshrl.u32 %v280, 7
    %v282 = vsub.s32 0, %v281
    %v283 = vrot.slane %v278, %v282
    %v301 = vunpack.c.l.b16 %v262
    %v302 = vunpack.c.l.b16 %v263
    %v303 = vunpack.c.l.b16 %v264
    %v304 = vunpack.c.l.b16 %v265
    %v305 = vunpack.c.l.b16 %v266
    %v306 = vunpack.c.l.b16 %v267
    %v307 = vunpack.c.l.b16 %v268
    %v308 = vunpack.c.l.b16 %v269
    %v309 = vunpack.c.l.b16 %v270
    %v310 = vunpack.c.l.b16 %v271
    %v311 = vunpack.c.l.b16 %v272
    %v312 = vunpack.c.l.b16 %v273
    %v313 = vunpack.c.l.b16 %v274
    %v314 = vunpack.c.l.b16 %v275
    %v315 = vunpack.c.l.b16 %v276
    %v316 = vunpack.c.l.b16 %v277
    %v317 = vpack.c.b16 %v302, %v301
    %v318 = vpack.c.b16 %v304, %v303
    %v319 = vpack.c.b16 %v306, %v305
    %v320 = vpack.c.b16 %v308, %v307
    %v321 = vpack.c.b16 %v310, %v309
    %v322 = vpack.c.b16 %v312, %v311
    %v323 = vpack.c.b16 %v314, %v313
    %v324 = vpack.c.b16 %v316, %v315
    %333 = vmatprep.subr.bf16.mxu0 0
    %334 = vmatpush1.bf16.msra.mxu0 %v324
    %335 = vmatprep.subr.bf16.mxu0 0
    %336 = vmatpush1.bf16.msra.mxu0 %v323
    %337 = vmatprep.subr.bf16.mxu0 0
    %338 = vmatpush1.bf16.msra.mxu0 %v322
    %339 = vmatprep.subr.bf16.mxu0 0
    %340 = vmatpush1.bf16.msra.mxu0 %v321
    %341 = vmatprep.subr.bf16.mxu0 0
    %342 = vmatpush1.bf16.msra.mxu0 %v320
    %343 = vmatprep.subr.bf16.mxu0 0
    %344 = vmatpush1.bf16.msra.mxu0 %v319
    %345 = vmatprep.subr.bf16.mxu0 0
    %346 = vmatpush1.bf16.msra.mxu0 %v318
    %347 = vmatprep.subr.bf16.mxu0 0
    %348 = vmatpush1.bf16.msra.mxu0 %v317
    %349 = vmatprep.subr.bf16.mxu0 0
    %350 = vmatpush2.bf16.msra.mxu0 0
    %351 = vmatprep.subr.bf16.mxu0 0
    %352 = vmatpush2.bf16.msra.mxu0 0
    %353 = vmatprep.subr.bf16.mxu0 0
    %354 = vmatpush2.bf16.msra.mxu0 0
    %355 = vmatprep.subr.bf16.mxu0 0
    %356 = vmatpush2.bf16.msra.mxu0 0
    %357 = vmatprep.subr.bf16.mxu0 0
    %358 = vmatpush2.bf16.msra.mxu0 0
    %359 = vmatprep.subr.bf16.mxu0 0
    %360 = vmatpush2.bf16.msra.mxu0 0
    %361 = vmatprep.subr.bf16.mxu0 0
    %362 = vmatpush2.bf16.msra.mxu0 0
    %363 = vmatprep.subr.bf16.mxu0 0
    %364 = vmatpush2.bf16.msra.mxu0 0
    %365 = vmatprep.mubr.bf16.mxu0 0
    %366 = vmatmul.mubr.bf16.gmra.mxu0 %v261
    %v367 = vpop.f32.mrf.mxu0
    %v368 = vadd.f32 %v283, %v367
    %v369 = vpop.f32.mrf.mxu0
    %v370 = vpop.f32.mrf.mxu0
    %v371 = vpop.f32.mrf.mxu0
    %372 = vdwg.mxu0
    %v373 = vmax.f32 %v368, 0.0
    %v374 = vpack.c.bf16 %v373, %v373
    %v375 = vld [vmem:[#allocation8] sm:$0xf]
    %v376 = vld [vmem:[#allocation8 + $0x4] sm:$0xf]
    %v377 = vld [vmem:[#allocation8 + $0x8] sm:$0xf]
    %v378 = vld [vmem:[#allocation8 + $0xc] sm:$0xf]
    %v379 = vld [vmem:[#allocation8 + $0x10] sm:$0xf]
    %v380 = vld [vmem:[#allocation8 + $0x14] sm:$0xf]
    %v381 = vld [vmem:[#allocation8 + $0x18] sm:$0xf]
    %v382 = vld [vmem:[#allocation8 + $0x1c] sm:$0xf]
    %v383 = vld [vmem:[#allocation8 + $0x20] sm:$0xf]
    %v384 = vld [vmem:[#allocation8 + $0x24] sm:$0xf]
    %v385 = vld [vmem:[#allocation8 + $0x28] sm:$0xf]
    %v386 = vld [vmem:[#allocation8 + $0x2c] sm:$0xf]
    %v387 = vld [vmem:[#allocation8 + $0x30] sm:$0xf]
    %v388 = vld [vmem:[#allocation8 + $0x34] sm:$0xf]
    %v389 = vld [vmem:[#allocation8 + $0x38] sm:$0xf]
    %v390 = vld [vmem:[#allocation8 + $0x3c] sm:$0xf]
    %v391 = vld [vmem:[%s6] sm:$0x1]
    %v393 = vlaneseq
    %v394 = vshrl.u32 %v393, 7
    %v395 = vsub.s32 0, %v394
    %v396 = vrot.slane %v391, %v395
    %v414 = vunpack.c.l.b16 %v375
    %v415 = vunpack.c.l.b16 %v376
    %v416 = vunpack.c.l.b16 %v377
    %v417 = vunpack.c.l.b16 %v378
    %v418 = vunpack.c.l.b16 %v379
    %v419 = vunpack.c.l.b16 %v380
    %v420 = vunpack.c.l.b16 %v381
    %v421 = vunpack.c.l.b16 %v382
    %v422 = vunpack.c.l.b16 %v383
    %v423 = vunpack.c.l.b16 %v384
    %v424 = vunpack.c.l.b16 %v385
    %v425 = vunpack.c.l.b16 %v386
    %v426 = vunpack.c.l.b16 %v387
    %v427 = vunpack.c.l.b16 %v388
    %v428 = vunpack.c.l.b16 %v389
    %v429 = vunpack.c.l.b16 %v390
    %v430 = vpack.c.b16 %v415, %v414
    %v431 = vpack.c.b16 %v417, %v416
    %v432 = vpack.c.b16 %v419, %v418
    %v433 = vpack.c.b16 %v421, %v420
    %v434 = vpack.c.b16 %v423, %v422
    %v435 = vpack.c.b16 %v425, %v424
    %v436 = vpack.c.b16 %v427, %v426
    %v437 = vpack.c.b16 %v429, %v428
    %446 = vmatprep.subr.bf16.mxu0 0
    %447 = vmatpush1.bf16.msra.mxu0 %v437
    %448 = vmatprep.subr.bf16.mxu0 0
    %449 = vmatpush1.bf16.msra.mxu0 %v436
    %450 = vmatprep.subr.bf16.mxu0 0
    %451 = vmatpush1.bf16.msra.mxu0 %v435
    %452 = vmatprep.subr.bf16.mxu0 0
    %453 = vmatpush1.bf16.msra.mxu0 %v434
    %454 = vmatprep.subr.bf16.mxu0 0
    %455 = vmatpush1.bf16.msra.mxu0 %v433
    %456 = vmatprep.subr.bf16.mxu0 0
    %457 = vmatpush1.bf16.msra.mxu0 %v432
    %458 = vmatprep.subr.bf16.mxu0 0
    %459 = vmatpush1.bf16.msra.mxu0 %v431
    %460 = vmatprep.subr.bf16.mxu0 0
    %461 = vmatpush1.bf16.msra.mxu0 %v430
    %462 = vmatprep.subr.bf16.mxu0 0
    %463 = vmatpush2.bf16.msra.mxu0 0
    %464 = vmatprep.subr.bf16.mxu0 0
    %465 = vmatpush2.bf16.msra.mxu0 0
    %466 = vmatprep.subr.bf16.mxu0 0
    %467 = vmatpush2.bf16.msra.mxu0 0
    %468 = vmatprep.subr.bf16.mxu0 0
    %469 = vmatpush2.bf16.msra.mxu0 0
    %470 = vmatprep.subr.bf16.mxu0 0
    %471 = vmatpush2.bf16.msra.mxu0 0
    %472 = vmatprep.subr.bf16.mxu0 0
    %473 = vmatpush2.bf16.msra.mxu0 0
    %474 = vmatprep.subr.bf16.mxu0 0
    %475 = vmatpush2.bf16.msra.mxu0 0
    %476 = vmatprep.subr.bf16.mxu0 0
    %477 = vmatpush2.bf16.msra.mxu0 0
    %478 = vmatprep.mubr.bf16.mxu0 0
    %479 = vmatmul.mubr.bf16.gmra.mxu0 %v374
    %v480 = vpop.f32.mrf.mxu0
    %v481 = vadd.f32 %v396, %v480
    %v482 = vpop.f32.mrf.mxu0
    %v483 = vpop.f32.mrf.mxu0
    %v484 = vpop.f32.mrf.mxu0
    %485 = vdwg.mxu0
    %486 = vmax.xlane.f32.xlu0 %v481
    %v487 = vpop.xlane.xlu0 %486
    %v488 = vsub.f32 %v481, %v487
    %v489 = vmul.f32 %v488, 1.442695
    %v490 = vpow.pop %v489
    %491 = vadd.xlane.f32.xlu0 %v490
    %v492 = vpop.xlane.xlu0 %491
    %v493 = vlog2.pop %v492
    %v494 = vmul.f32 %v493, 0.6931472
    %v495 = vsub.f32 %v488, %v494
    %vm496 = vcmask 130048
    %497 = vst.msk [vmem:[#allocation10] sm:$0xff] %vm496, %v495
    // Predicated region
    $region46: #{tpu_custom_call.1} parent=1 // pred_check
      _
    $region47: #{tpu_custom_call.1} parent=1 // pred_check_branch
      %499 = sbr.rel (0) target = $region49
    $region48: #{tpu_custom_call.1} parent=1 // pred_region
      %s501 = ssub.s32 128, 128
      %502 = vsyncadd [#allocation4], %s501
      %s504 = sshll.u32 [#allocation10], 4
      %s505 = int_to_ptr.vmem [resolvable:$true] %s504
      %507 = dma.vmem_to_hbm [thread:$0]  %s505, 128, %s7, [#allocation4]
    $region49: #{tpu_custom_call.1} parent=1 // pred_fallthru
      _
    // Predicated region
    $region50: #{tpu_custom_call.1} parent=1 // pred_check
      _
    $region51: #{tpu_custom_call.1} parent=1 // pred_check_branch
      %509 = sbr.rel (0) target = $region53
    $region52: #{tpu_custom_call.1} parent=1 // pred_region
      %510 = dma.done [#allocation4], 128
    $region53: #{tpu_custom_call.1} parent=1 // pred_fallthru
      _
    %511 = vsyncpa [#allocation3], 1
    %512 = vsyncpa [#allocation6], 1
    %513 = vsyncpa [#allocation9], 1
    %514 = vsyncpa [#allocation4], 1

</llo_original>
